<compile_context>
chip_gen: v7x
topology: tpu7x:2x2x1
jax: 0.10.0
libtpu: 0.0.40
codegen_flags: <defaults>
</compile_context>

<pallas_src>
import functools

import jax
import jax.numpy as jnp
from jax import lax
from jax.experimental import pallas as pl
from jax.experimental.pallas import tpu as pltpu


# ----------------------------------------------------------------------------
# Tile selection / constants
# ----------------------------------------------------------------------------
_TM = 512                     # GEMM row (sequence) tile target
_TN = 1024                    # GEMM output-feature tile target
_TK = 1024                    # GEMM reduction tile target
_TQ = 512                     # attention query-row tile target (128-aligned)
_SEQ_PAD = 256                # sequence length padded to a multiple of this
_VMEM_LIMIT = 48 * 1024 * 1024  # fits v5e/v6e (128 MiB) and v7x (64 MiB) physical VMEM


def _choose_tile(dim, target, align):
    """Largest multiple of `align` <= target that evenly divides dim.

    Returns the full dim for small dims; raises instead of silently blowing up
    VMEM when a large dim has no aligned divisor (pad it upstream instead)."""
    if dim <= target or dim <= align:
        return dim
    t = (target // align) * align
    while t >= align:
        if dim % t == 0:
            return t
        t -= align
    raise ValueError(
        f"dimension {dim} has no tile that is a multiple of {align}; pad it "
        "before calling the Pallas kernels")


# ----------------------------------------------------------------------------
# Kernels
# ----------------------------------------------------------------------------
def rms_stats_kernel(x_ref, o_ref, *, eps):
    # per-row 1/rms(x) in f32
    x = x_ref[...].astype(jnp.float32)
    var = jnp.mean(x * x, axis=-1, keepdims=True)
    o_ref[...] = lax.rsqrt(var + eps)


def rmsnorm_kernel(x_ref, g_ref, o_ref, *, eps):
    x = x_ref[...].astype(jnp.float32)
    var = jnp.mean(x * x, axis=-1, keepdims=True)
    y = x * lax.rsqrt(var + eps) * g_ref[...].astype(jnp.float32)
    o_ref[...] = y.astype(o_ref.dtype)


def norm_linear_kernel(x_ref, g_ref, s_ref, w_ref, o_ref, acc_ref):
    # fused RMSNorm + (x_norm @ W^T); W stored (out, in)
    k = pl.program_id(2)

    @pl.when(k == 0)
    def _():
        acc_ref[...] = jnp.zeros(acc_ref.shape, acc_ref.dtype)

    xn = (x_ref[...].astype(jnp.float32) * s_ref[...]
          * g_ref[...].astype(jnp.float32)).astype(w_ref.dtype)
    acc_ref[...] += lax.dot_general(
        xn, w_ref[...], (((1,), (1,)), ((), ())),
        preferred_element_type=jnp.float32)

    @pl.when(k == pl.num_programs(2) - 1)
    def _():
        o_ref[...] = acc_ref[...].astype(o_ref.dtype)


def norm_gate_up_silu_kernel(x_ref, g_ref, s_ref, wg_ref, wu_ref, o_ref,
                             accg_ref, accu_ref):
    # fused RMSNorm + gate/up projections + SiLU-and-mul (never materializes (T, 2I))
    k = pl.program_id(2)

    @pl.when(k == 0)
    def _():
        accg_ref[...] = jnp.zeros(accg_ref.shape, accg_ref.dtype)
        accu_ref[...] = jnp.zeros(accu_ref.shape, accu_ref.dtype)

    xn = (x_ref[...].astype(jnp.float32) * s_ref[...]
          * g_ref[...].astype(jnp.float32)).astype(wg_ref.dtype)
    accg_ref[...] += lax.dot_general(
        xn, wg_ref[...], (((1,), (1,)), ((), ())),
        preferred_element_type=jnp.float32)
    accu_ref[...] += lax.dot_general(
        xn, wu_ref[...], (((1,), (1,)), ((), ())),
        preferred_element_type=jnp.float32)

    @pl.when(k == pl.num_programs(2) - 1)
    def _():
        gate = accg_ref[...]
        up = accu_ref[...]
        o_ref[...] = (gate * jax.nn.sigmoid(gate) * up).astype(o_ref.dtype)


def linear_residual_kernel(x_ref, w_ref, r_ref, o_ref, acc_ref):
    # (x @ W^T) + residual, residual added only on the last K tile
    k = pl.program_id(2)

    @pl.when(k == 0)
    def _():
        acc_ref[...] = jnp.zeros(acc_ref.shape, acc_ref.dtype)

    acc_ref[...] += lax.dot_general(
        x_ref[...], w_ref[...], (((1,), (1,)), ((), ())),
        preferred_element_type=jnp.float32)

    @pl.when(k == pl.num_programs(2) - 1)
    def _():
        o_ref[...] = (acc_ref[...] + r_ref[...].astype(jnp.float32)).astype(o_ref.dtype)


def flash_attn_kernel(q_ref, cosq_ref, sinq_ref, k_ref, v_ref, cosk_ref, sink_ref,
                      o_ref, qrot_sc, m_sc, l_sc, acc_sc,
                      *, scale, tq, tkv, rep, dh):
    # Causal flash attention with GQA head-grouping and fused neox RoPE.
    # q block: (rep, tq, dh); k/v block: (1, tkv, dh); softmax kept strictly f32.
    qi = pl.program_id(1)
    ki = pl.program_id(2)
    nk = pl.num_programs(2)

    q_start = qi * tq
    q_last = q_start + (tq - 1)
    k_start = ki * tkv
    k_last = k_start + (tkv - 1)

    def rotate(xf, cos, sin):
        # neox rotate-half: concat(-x2, x1); all in f32
        x1 = xf[:, : dh // 2]
        x2 = xf[:, dh // 2:]
        return xf * cos + jnp.concatenate([-x2, x1], axis=-1) * sin

    @pl.when(ki == 0)
    def _init():
        m_sc[...] = jnp.full(m_sc.shape, -jnp.inf, m_sc.dtype)
        l_sc[...] = jnp.zeros(l_sc.shape, l_sc.dtype)
        acc_sc[...] = jnp.zeros(acc_sc.shape, acc_sc.dtype)
        cos = cosq_ref[...]
        sin = sinq_ref[...]
        for r in range(rep):
            # rotate + pre-scale q once per (kv_head, q_tile)
            qe = rotate(q_ref[r, :, :].astype(jnp.float32), cos, sin) * scale
            qrot_sc[r, :, :] = qe.astype(qrot_sc.dtype)

    def process(apply_mask):
        ke = rotate(k_ref[0, :, :].astype(jnp.float32), cosk_ref[...], sink_ref[...])
        ke = ke.astype(qrot_sc.dtype)          # (tkv, dh)
        vv = v_ref[0, :, :]                    # (tkv, dh)
        for r in range(rep):
            s = lax.dot_general(qrot_sc[r, :, :], ke, (((1,), (1,)), ((), ())),
                                preferred_element_type=jnp.float32)   # (tq, tkv) f32
            if apply_mask:
                q_pos = q_start + lax.broadcasted_iota(jnp.int32, s.shape, 0)
                k_pos = k_start + lax.broadcasted_iota(jnp.int32, s.shape, 1)
                s = jnp.where(k_pos <= q_pos, s, -1e30)
            m_prev = m_sc[r]
            m_new = jnp.maximum(m_prev, jnp.max(s, axis=-1, keepdims=True))
            alpha = jnp.exp(m_prev - m_new)
            p = jnp.exp(s - m_new)
            l_sc[r] = alpha * l_sc[r] + jnp.sum(p, axis=-1, keepdims=True)
            acc_sc[r] = alpha * acc_sc[r] + jnp.dot(
                p.astype(vv.dtype), vv, preferred_element_type=jnp.float32)
            m_sc[r] = m_new

    # fully-visible tiles: skip the mask entirely
    @pl.when(k_last <= q_start)
    def _no_mask():
        process(False)

    # diagonal-straddling tiles: apply the causal mask
    @pl.when(jnp.logical_and(k_start <= q_last, k_last > q_start))
    def _masked():
        process(True)

    @pl.when(ki == nk - 1)
    def _finalize():
        for r in range(rep):
            # approx reciprocal (~2^-12 rel. error) -- fine for inference
            inv_l = pl.reciprocal(l_sc[r], approx=True)
            o_ref[r, :, :] = (acc_sc[r] * inv_l).astype(o_ref.dtype)


# ----------------------------------------------------------------------------
# Pallas wrappers
# ----------------------------------------------------------------------------
def rms_stats(x, eps):
    M, K = x.shape
    tm = _choose_tile(M, _TM, 16)
    return pl.pallas_call(
        functools.partial(rms_stats_kernel, eps=eps),
        out_shape=jax.ShapeDtypeStruct((M, 1), jnp.float32),
        grid=(M // tm,),
        in_specs=[pl.BlockSpec((tm, K), lambda i: (i, 0))],
        out_specs=pl.BlockSpec((tm, 1), lambda i: (i, 0)),
        compiler_params=pltpu.CompilerParams(dimension_semantics=("parallel",)),
    )(x)


def rmsnorm(x, gamma, eps):
    M, K = x.shape
    tm = _choose_tile(M, _TM, 16)
    return pl.pallas_call(
        functools.partial(rmsnorm_kernel, eps=eps),
        out_shape=jax.ShapeDtypeStruct((M, K), x.dtype),
        grid=(M // tm,),
        in_specs=[pl.BlockSpec((tm, K), lambda i: (i, 0)),
                  pl.BlockSpec((1, K), lambda i: (0, 0))],
        out_specs=pl.BlockSpec((tm, K), lambda i: (i, 0)),
        compiler_params=pltpu.CompilerParams(dimension_semantics=("parallel",)),
    )(x, gamma.reshape(1, -1))


def fused_norm_linear(x, gamma, inv_rms, w):
    M, K = x.shape
    N = w.shape[0]
    tm = _choose_tile(M, _TM, 16)
    tn = _choose_tile(N, _TN, 128)
    tk = _choose_tile(K, _TK, 128)
    return pl.pallas_call(
        norm_linear_kernel,
        out_shape=jax.ShapeDtypeStruct((M, N), x.dtype),
        grid_spec=pltpu.PrefetchScalarGridSpec(
            num_scalar_prefetch=0,
            grid=(M // tm, N // tn, K // tk),
            in_specs=[
                pl.BlockSpec((tm, tk), lambda i, j, k: (i, k)),
                pl.BlockSpec((1, tk), lambda i, j, k: (0, k)),
                pl.BlockSpec((tm, 1), lambda i, j, k: (i, 0)),
                pl.BlockSpec((tn, tk), lambda i, j, k: (j, k)),
            ],
            out_specs=pl.BlockSpec((tm, tn), lambda i, j, k: (i, j)),
            scratch_shapes=[pltpu.VMEM((tm, tn), jnp.float32)]),
        compiler_params=pltpu.CompilerParams(
            dimension_semantics=("parallel", "parallel", "arbitrary"),
            vmem_limit_bytes=_VMEM_LIMIT),
    )(x, gamma.reshape(1, -1), inv_rms, w)


def fused_norm_gate_up_silu(x, gamma, inv_rms, w_gate, w_up):
    M, K = x.shape
    I = w_gate.shape[0]
    tm = _choose_tile(M, _TM, 16)
    ti = _choose_tile(I, _TN, 128)
    tk = _choose_tile(K, _TK, 128)
    return pl.pallas_call(
        norm_gate_up_silu_kernel,
        out_shape=jax.ShapeDtypeStruct((M, I), x.dtype),
        grid_spec=pltpu.PrefetchScalarGridSpec(
            num_scalar_prefetch=0,
            grid=(M // tm, I // ti, K // tk),
            in_specs=[
                pl.BlockSpec((tm, tk), lambda i, j, k: (i, k)),
                pl.BlockSpec((1, tk), lambda i, j, k: (0, k)),
                pl.BlockSpec((tm, 1), lambda i, j, k: (i, 0)),
                pl.BlockSpec((ti, tk), lambda i, j, k: (j, k)),
                pl.BlockSpec((ti, tk), lambda i, j, k: (j, k)),
            ],
            out_specs=pl.BlockSpec((tm, ti), lambda i, j, k: (i, j)),
            scratch_shapes=[pltpu.VMEM((tm, ti), jnp.float32),
                            pltpu.VMEM((tm, ti), jnp.float32)]),
        compiler_params=pltpu.CompilerParams(
            dimension_semantics=("parallel", "parallel", "arbitrary"),
            vmem_limit_bytes=_VMEM_LIMIT),
    )(x, gamma.reshape(1, -1), inv_rms, w_gate, w_up)


def linear_residual(x, w, residual):
    M, K = x.shape
    N = w.shape[0]
    tm = _choose_tile(M, _TM, 16)
    tn = _choose_tile(N, _TN, 128)
    tk = _choose_tile(K, _TK, 128)
    return pl.pallas_call(
        linear_residual_kernel,
        out_shape=jax.ShapeDtypeStruct((M, N), x.dtype),
        grid_spec=pltpu.PrefetchScalarGridSpec(
            num_scalar_prefetch=0,
            grid=(M // tm, N // tn, K // tk),
            in_specs=[
                pl.BlockSpec((tm, tk), lambda i, j, k: (i, k)),
                pl.BlockSpec((tn, tk), lambda i, j, k: (j, k)),
                pl.BlockSpec((tm, tn), lambda i, j, k: (i, j)),
            ],
            out_specs=pl.BlockSpec((tm, tn), lambda i, j, k: (i, j)),
            scratch_shapes=[pltpu.VMEM((tm, tn), jnp.float32)]),
        compiler_params=pltpu.CompilerParams(
            dimension_semantics=("parallel", "parallel", "arbitrary"),
            vmem_limit_bytes=_VMEM_LIMIT),
    )(x, w, residual)


def flash_attention(q, k, v, cos, sin, scale):
    # q: (H, T, D)  k/v: (KV, T, D)  cos/sin: (T, D) f32
    H, T, D = q.shape
    KV = k.shape[0]
    rep = H // KV
    tq = _choose_tile(T, _TQ, 128)
    tkv = tq   # kept equal so each row of a diagonal tile always sees itself

    def kv_block(qi, ki):
        # remap fully-masked future kv tiles onto the last needed one so the
        # pipeline issues no new DMA for them (causal K/V traffic ~halved)
        last = (qi * tq + tq - 1) // tkv
        return jnp.minimum(ki, last)

    kernel = functools.partial(flash_attn_kernel, scale=scale, tq=tq, tkv=tkv,
                               rep=rep, dh=D)
    return pl.pallas_call(
        kernel,
        out_shape=jax.ShapeDtypeStruct((H, T, D), q.dtype),
        grid_spec=pltpu.PrefetchScalarGridSpec(
            num_scalar_prefetch=0,
            grid=(KV, T // tq, T // tkv),
            in_specs=[
                pl.BlockSpec((rep, tq, D), lambda h, qi, ki: (h, qi, 0)),
                pl.BlockSpec((tq, D), lambda h, qi, ki: (qi, 0)),
                pl.BlockSpec((tq, D), lambda h, qi, ki: (qi, 0)),
                pl.BlockSpec((1, tkv, D), lambda h, qi, ki: (h, kv_block(qi, ki), 0)),
                pl.BlockSpec((1, tkv, D), lambda h, qi, ki: (h, kv_block(qi, ki), 0)),
                pl.BlockSpec((tkv, D), lambda h, qi, ki: (kv_block(qi, ki), 0)),
                pl.BlockSpec((tkv, D), lambda h, qi, ki: (kv_block(qi, ki), 0)),
            ],
            out_specs=pl.BlockSpec((rep, tq, D), lambda h, qi, ki: (h, qi, 0)),
            scratch_shapes=[pltpu.VMEM((rep, tq, D), q.dtype),     # rotated, scaled q
                            pltpu.VMEM((rep, tq, 1), jnp.float32),  # running max
                            pltpu.VMEM((rep, tq, 1), jnp.float32),  # running sum
                            pltpu.VMEM((rep, tq, D), jnp.float32)]),
        compiler_params=pltpu.CompilerParams(
            dimension_semantics=("parallel", "parallel", "arbitrary"),
            vmem_limit_bytes=_VMEM_LIMIT),
    )(q, cos, sin, k, v, cos, sin)


# ----------------------------------------------------------------------------
# Model glue (plain JAX)
# ----------------------------------------------------------------------------
def rope_cos_sin(positions, dh, theta):
    """neox-style cos/sin tables, shape (T, dh), f32."""
    inv_freq = 1.0 / (theta ** (jnp.arange(0, dh, 2, dtype=jnp.float32) / dh))
    angles = positions.astype(jnp.float32)[:, None] * inv_freq[None, :]   # (T, dh/2)
    cos = jnp.concatenate([jnp.cos(angles), jnp.cos(angles)], axis=-1)
    sin = jnp.concatenate([jnp.sin(angles), jnp.sin(angles)], axis=-1)
    return cos, sin


def decoder_layer(params, hidden, cos, sin, cfg):
    H = cfg["num_attention_heads"]
    KV = cfg["num_key_value_heads"]
    D = cfg["hidden_size"] // H
    eps = cfg["rms_norm_eps"]
    T = hidden.shape[0]

    # --- self attention (input RMSNorm fused into qkv_proj, RoPE fused into attn) ---
    residual = hidden
    inv = rms_stats(hidden, eps)                                   # (T, 1) f32
    qkv = fused_norm_linear(hidden, params["input_layernorm"], inv,
                            params["qkv_proj"])                    # (T, (H+2KV)*D)
    q, k, v = jnp.split(qkv, [H * D, (H + KV) * D], axis=-1)
    # TODO(synk): head transposes remain plain-XLA ops; fusing them into the attention
    # BlockSpecs would need sub-(8,128) head blocks, which we avoid for lowering safety.
    q = jnp.transpose(q.reshape(T, H, D), (1, 0, 2))               # (H, T, D)
    k = jnp.transpose(k.reshape(T, KV, D), (1, 0, 2))              # (KV, T, D)
    v = jnp.transpose(v.reshape(T, KV, D), (1, 0, 2))

    attn = flash_attention(q, k, v, cos, sin, D ** -0.5)           # (H, T, D)
    attn = jnp.transpose(attn, (1, 0, 2)).reshape(T, H * D)
    hidden = linear_residual(attn, params["o_proj"], residual)     # o_proj + residual

    # --- mlp (post-attn RMSNorm fused into gate_up; residual fused into down_proj) ---
    residual = hidden
    inv = rms_stats(hidden, eps)
    act = fused_norm_gate_up_silu(hidden, params["post_attention_layernorm"], inv,
                                  params["gate_proj"], params["up_proj"])   # (T, I)
    hidden = linear_residual(act, params["down_proj"], residual)
    return hidden


def llama_forward(params, token_ids, positions, kv_caches, cfg):
    # TODO(synk): paged KV-cache of the sarathi attention wrapper is emulated as
    # full-sequence causal prefill with an empty cache (kv_caches accepted, ignored).
    del kv_caches
    T = token_ids.shape[0]
    T_pad = ((T + _SEQ_PAD - 1) // _SEQ_PAD) * _SEQ_PAD

    # embed_tokens (first pipeline stage), pad rows so every kernel sees aligned tiles
    hidden = jnp.take(params["embed_tokens"], token_ids, axis=0)   # (T, hidden) bf16
    if T_pad != T:
        hidden = jnp.pad(hidden, ((0, T_pad - T), (0, 0)))
        positions = jnp.pad(positions, (0, T_pad - T))

    D = cfg["hidden_size"] // cfg["num_attention_heads"]
    cos, sin = rope_cos_sin(positions, D, cfg["rope_theta"])       # (T_pad, D) f32

    for layer_params in params["layers"]:
        hidden = decoder_layer(layer_params, hidden, cos, sin, cfg)

    # final norm (last pipeline stage)
    hidden = rmsnorm(hidden, params["norm"], cfg["rms_norm_eps"])
    # NOTE: lm_head is NOT applied in LlamaForCausalLM.forward; hidden states returned.
    return hidden[:T]


# ----------------------------------------------------------------------------
# Deterministic parameter init (bf16 weights, f32 norm gains)
# ----------------------------------------------------------------------------
def init_params(key, cfg):
    hid = cfg["hidden_size"]
    H = cfg["num_attention_heads"]
    KV = cfg["num_key_value_heads"]
    D = hid // H
    I = cfg["intermediate_size"]
    padded_vocab = (cfg["vocab_size"] + 63) // 64 * 64

    def w(k, shape, scale=0.02):
        return (scale * jax.random.normal(k, shape, dtype=jnp.float32)).astype(jnp.bfloat16)

    key, k_emb, k_head = jax.random.split(key, 3)
    params = {
        "embed_tokens": w(k_emb, (padded_vocab, hid)),
        "lm_head": w(k_head, (padded_vocab, hid)),  # unused in forward (matches torch)
        "norm": jnp.ones((hid,), jnp.float32),
        "layers": [],
    }
    for layer in range(cfg["num_hidden_layers"]):
        ks = jax.random.split(jax.random.fold_in(key, layer), 7)
        params["layers"].append({
            "input_layernorm": 1.0 + 0.01 * jax.random.normal(ks[0], (hid,), jnp.float32),
            "post_attention_layernorm": 1.0 + 0.01 * jax.random.normal(ks[1], (hid,), jnp.float32),
            "qkv_proj": w(ks[2], ((H + 2 * KV) * D, hid)),
            "o_proj": w(ks[3], (hid, H * D)),
            # gate_up_proj stored pre-split (gate = rows [:I], up = rows [I:]) so the
            # forward pass never has to slice-copy the packed weight in HBM.
            "gate_proj": w(ks[4], (I, hid)),
            "up_proj": w(ks[5], (I, hid)),
            "down_proj": w(ks[6], (hid, I)),
        })
    return params


# ----------------------------------------------------------------------------
# Main
# ----------------------------------------------------------------------------
if __name__ == "__main__":
    cfg = dict(
        vocab_size=128,
        hidden_size=512,            # head_dim = 128 (lane-aligned like real Llama)
        num_attention_heads=4,
        num_key_value_heads=2,      # GQA group size rep = 2
        intermediate_size=1024,
        num_hidden_layers=2,
        rms_norm_eps=1e-6,
        rope_theta=10000.0,
    )
    seq_len = 8

    root = jax.random.PRNGKey(0)
    k_params, k_tok = jax.random.split(root)
    params = init_params(k_params, cfg)

    token_ids = jax.random.randint(k_tok, (seq_len,), 0, cfg["vocab_size"], dtype=jnp.int32)
    positions = jnp.arange(seq_len, dtype=jnp.int32)
    kv_caches = [None] * cfg["num_hidden_layers"]  # empty prefill cache

    out = llama_forward(params, token_ids, positions, kv_caches, cfg)
    out = jax.block_until_ready(out)

    assert out.shape == (seq_len, cfg["hidden_size"])
    assert out.dtype == jnp.bfloat16
    assert bool(jnp.all(jnp.isfinite(out.astype(jnp.float32))))
    print("KERNEL_OK")
</pallas_src>

<mosaic_0001>
module attributes {stable_mosaic.version = 11 : i64} {
  func.func @rms_stats_kernel(%arg0: i32, %arg1: memref<256x512xbf16, #tpu.memory_space<vmem>>, %arg2: memref<256x1xf32, #tpu.memory_space<vmem>>) attributes {dimension_semantics = [#tpu.dimension_semantics<parallel>], iteration_bounds = array<i64: 1>, scalar_prefetch = 0 : i64, scratch_operands = 0 : i64, tpu.core_type = #tpu.core_type<tc>, window_params = [{transform_indices = @transform_0, window_bounds = array<i64: 256, 512>}, {transform_indices = @transform_1, window_bounds = array<i64: 256, 1>}]} {
    %c0 = arith.constant 0 : index
    %c0_0 = arith.constant 0 : index
    %0 = vector.load %arg1[%c0, %c0_0] : memref<256x512xbf16, #tpu.memory_space<vmem>>, vector<256x512xbf16>
    %1 = arith.extf %0 : vector<256x512xbf16> to vector<256x512xf32>
    %2 = arith.mulf %1, %1 : vector<256x512xf32>
    %cst = arith.constant dense<0.000000e+00> : vector<256xf32>
    %3 = vector.multi_reduction <add>, %2, %cst [1] : vector<256x512xf32> to vector<256xf32>
    %4 = vector.shape_cast %3 : vector<256xf32> to vector<256x1xf32>
    %cst_1 = arith.constant 5.120000e+02 : f32
    %5 = vector.broadcast %cst_1 : f32 to vector<256x1xf32>
    %6 = arith.divf %4, %5 : vector<256x1xf32>
    %cst_2 = arith.constant 9.99999997E-7 : f32
    %7 = vector.broadcast %cst_2 : f32 to vector<256x1xf32>
    %8 = arith.addf %6, %7 : vector<256x1xf32>
    %9 = math.rsqrt %8 : vector<256x1xf32>
    %c0_3 = arith.constant 0 : index
    %c0_4 = arith.constant 0 : index
    %10 = vector.load %arg2[%c0_3, %c0_4] : memref<256x1xf32, #tpu.memory_space<vmem>>, vector<256x1xf32>
    tpu.vector_store %arg2[%c0_3, %c0_4], %9 {strides = array<i32>} : memref<256x1xf32, #tpu.memory_space<vmem>>, vector<256x1xf32>,
    return
  }
  func.func @transform_0(%arg0: i32) -> (i32, i32) {
    %c0_i32 = arith.constant 0 : i32
    %c0_i32_0 = arith.constant 0 : i32
    return %arg0, %c0_i32 : i32, i32
  }
  func.func @transform_1(%arg0: i32) -> (i32, i32) {
    %c0_i32 = arith.constant 0 : i32
    %c0_i32_0 = arith.constant 0 : i32
    return %arg0, %c0_i32 : i32, i32
  }
}

</mosaic_0001>

<llo_original>
// kernel: tpu_custom_call.1
$region0: #{tpu_custom_call.1}
  #allocation0 [shape = 'u32[]', space=smem, size = 0x4, offset = 0x4, fixed_abs, tag = 'smem constant byte address 0x4 - core index']
  #allocation1 [shape = 'u32[144,128]{1,0:T(1,128)}', space=vmem, size = 0x12000, scoped, tag = 'internal scratch']
  %s0 = inlined_call_operand.hbm [shape: bf16[256,512], index: 0, kind: input, shape index: {}]
  %s1 = inlined_call_operand.vmem [shape: f32[256,1], index: 1, kind: output, shape index: {}]
  %s2 = sld [smem:[#allocation0]]
  $region18: #{tpu_custom_call.1} parent=0
    _
  %s4 = ssub.s32 1, %s2
  %s5 = scalar_select 0, %s4, %s2
  $region1: #{tpu_custom_call.1} parent=0
    #allocation2 [shape = 'u8[262144]{0}', space=vmem, size = 0x40000, scoped, tag = 'input window, operand 0, single buffered']
    #allocation3 [shape = 's32[1]{0}', space=sflag, size = 0x4, scoped, tag = 'scoped memory for tpu_custom_call.1']
    %6 = vsyncpa [#allocation3], 0
    // Predicated region
    $region2: #{tpu_custom_call.1} parent=1 // pred_check
      _
    $region3: #{tpu_custom_call.1} parent=1 // pred_check_branch
      %8 = sbr.rel (0) target = $region5
    $region4: #{tpu_custom_call.1} parent=1 // pred_region
      %s10 = ssub.s32 8192, 8192
      %11 = vsyncadd [#allocation3], %s10
      %s12 = sshll.u32 [#allocation2], 4
      %s13 = int_to_ptr.vmem [resolvable:$true] %s12
      %18 = dma.hbm_to_vmem [thread:$0]  %s0, 8192, %s13, [#allocation3], 256, 256, 16
    $region5: #{tpu_custom_call.1} parent=1 // pred_fallthru
      _
    // Predicated region
    $region6: #{tpu_custom_call.1} parent=1 // pred_check
      _
    $region7: #{tpu_custom_call.1} parent=1 // pred_check_branch
      %20 = sbr.rel (0) target = $region9
    $region8: #{tpu_custom_call.1} parent=1 // pred_region
      %21 = dma.done [#allocation3], 8192
    $region9: #{tpu_custom_call.1} parent=1 // pred_fallthru
      _
    %v22 = vld [vmem:[#allocation2] sm:$0xff]
    %v23 = vld [vmem:[#allocation2 + $0x8] sm:$0xff]
    %v24 = vld [vmem:[#allocation2 + $0x10] sm:$0xff]
    %v25 = vld [vmem:[#allocation2 + $0x18] sm:$0xff]
    %v26 = vld [vmem:[#allocation2 + $0x20] sm:$0xff]
    %v27 = vld [vmem:[#allocation2 + $0x28] sm:$0xff]
    %v28 = vld [vmem:[#allocation2 + $0x30] sm:$0xff]
    %v29 = vld [vmem:[#allocation2 + $0x38] sm:$0xff]
    %v30 = vld [vmem:[#allocation2 + $0x40] sm:$0xff]
    %v31 = vld [vmem:[#allocation2 + $0x48] sm:$0xff]
    %v32 = vld [vmem:[#allocation2 + $0x50] sm:$0xff]
    %v33 = vld [vmem:[#allocation2 + $0x58] sm:$0xff]
    %v34 = vld [vmem:[#allocation2 + $0x60] sm:$0xff]
    %v35 = vld [vmem:[#allocation2 + $0x68] sm:$0xff]
    %v36 = vld [vmem:[#allocation2 + $0x70] sm:$0xff]
    %v37 = vld [vmem:[#allocation2 + $0x78] sm:$0xff]
    %v38 = vld [vmem:[#allocation2 + $0x80] sm:$0xff]
    %v39 = vld [vmem:[#allocation2 + $0x88] sm:$0xff]
    %v40 = vld [vmem:[#allocation2 + $0x90] sm:$0xff]
    %v41 = vld [vmem:[#allocation2 + $0x98] sm:$0xff]
    %v42 = vld [vmem:[#allocation2 + $0xa0] sm:$0xff]
    %v43 = vld [vmem:[#allocation2 + $0xa8] sm:$0xff]
    %v44 = vld [vmem:[#allocation2 + $0xb0] sm:$0xff]
    %v45 = vld [vmem:[#allocation2 + $0xb8] sm:$0xff]
    %v46 = vld [vmem:[#allocation2 + $0xc0] sm:$0xff]
    %v47 = vld [vmem:[#allocation2 + $0xc8] sm:$0xff]
    %v48 = vld [vmem:[#allocation2 + $0xd0] sm:$0xff]
    %v49 = vld [vmem:[#allocation2 + $0xd8] sm:$0xff]
    %v50 = vld [vmem:[#allocation2 + $0xe0] sm:$0xff]
    %v51 = vld [vmem:[#allocation2 + $0xe8] sm:$0xff]
    %v52 = vld [vmem:[#allocation2 + $0xf0] sm:$0xff]
    %v53 = vld [vmem:[#allocation2 + $0xf8] sm:$0xff]
    %v54 = vld [vmem:[#allocation2 + $0x100] sm:$0xff]
    %v55 = vld [vmem:[#allocation2 + $0x108] sm:$0xff]
    %v56 = vld [vmem:[#allocation2 + $0x110] sm:$0xff]
    %v57 = vld [vmem:[#allocation2 + $0x118] sm:$0xff]
    %v58 = vld [vmem:[#allocation2 + $0x120] sm:$0xff]
    %v59 = vld [vmem:[#allocation2 + $0x128] sm:$0xff]
    %v60 = vld [vmem:[#allocation2 + $0x130] sm:$0xff]
    %v61 = vld [vmem:[#allocation2 + $0x138] sm:$0xff]
    %v62 = vld [vmem:[#allocation2 + $0x140] sm:$0xff]
    %v63 = vld [vmem:[#allocation2 + $0x148] sm:$0xff]
    %v64 = vld [vmem:[#allocation2 + $0x150] sm:$0xff]
    %v65 = vld [vmem:[#allocation2 + $0x158] sm:$0xff]
    %v66 = vld [vmem:[#allocation2 + $0x160] sm:$0xff]
    %v67 = vld [vmem:[#allocation2 + $0x168] sm:$0xff]
    %v68 = vld [vmem:[#allocation2 + $0x170] sm:$0xff]
    %v69 = vld [vmem:[#allocation2 + $0x178] sm:$0xff]
    %v70 = vld [vmem:[#allocation2 + $0x180] sm:$0xff]
    %v71 = vld [vmem:[#allocation2 + $0x188] sm:$0xff]
    %v72 = vld [vmem:[#allocation2 + $0x190] sm:$0xff]
    %v73 = vld [vmem:[#allocation2 + $0x198] sm:$0xff]
    %v74 = vld [vmem:[#allocation2 + $0x1a0] sm:$0xff]
    %v75 = vld [vmem:[#allocation2 + $0x1a8] sm:$0xff]
    %v76 = vld [vmem:[#allocation2 + $0x1b0] sm:$0xff]
    %v77 = vld [vmem:[#allocation2 + $0x1b8] sm:$0xff]
    %v78 = vld [vmem:[#allocation2 + $0x1c0] sm:$0xff]
    %v79 = vld [vmem:[#allocation2 + $0x1c8] sm:$0xff]
    %v80 = vld [vmem:[#allocation2 + $0x1d0] sm:$0xff]
    %v81 = vld [vmem:[#allocation2 + $0x1d8] sm:$0xff]
    %v82 = vld [vmem:[#allocation2 + $0x1e0] sm:$0xff]
    %v83 = vld [vmem:[#allocation2 + $0x1e8] sm:$0xff]
    %v84 = vld [vmem:[#allocation2 + $0x1f0] sm:$0xff]
    %v85 = vld [vmem:[#allocation2 + $0x1f8] sm:$0xff]
    %v86 = vunpack.c.l.bf16 %v22
    %v87 = vunpack.c.h.bf16 %v22
    %v88 = vunpack.c.l.bf16 %v23
    %v89 = vunpack.c.h.bf16 %v23
    %v90 = vunpack.c.l.bf16 %v24
    %v91 = vunpack.c.h.bf16 %v24
    %v92 = vunpack.c.l.bf16 %v25
    %v93 = vunpack.c.h.bf16 %v25
    %v94 = vunpack.c.l.bf16 %v26
    %v95 = vunpack.c.h.bf16 %v26
    %v96 = vunpack.c.l.bf16 %v27
    %v97 = vunpack.c.h.bf16 %v27
    %v98 = vunpack.c.l.bf16 %v28
    %v99 = vunpack.c.h.bf16 %v28
    %v100 = vunpack.c.l.bf16 %v29
    %v101 = vunpack.c.h.bf16 %v29
    %v102 = vunpack.c.l.bf16 %v30
    %v103 = vunpack.c.h.bf16 %v30
    %v104 = vunpack.c.l.bf16 %v31
    %v105 = vunpack.c.h.bf16 %v31
    %v106 = vunpack.c.l.bf16 %v32
    %v107 = vunpack.c.h.bf16 %v32
    %v108 = vunpack.c.l.bf16 %v33
    %v109 = vunpack.c.h.bf16 %v33
    %v110 = vunpack.c.l.bf16 %v34
    %v111 = vunpack.c.h.bf16 %v34
    %v112 = vunpack.c.l.bf16 %v35
    %v113 = vunpack.c.h.bf16 %v35
    %v114 = vunpack.c.l.bf16 %v36
    %v115 = vunpack.c.h.bf16 %v36
    %v116 = vunpack.c.l.bf16 %v37
    %v117 = vunpack.c.h.bf16 %v37
    %v118 = vunpack.c.l.bf16 %v38
    %v119 = vunpack.c.h.bf16 %v38
    %v120 = vunpack.c.l.bf16 %v39
    %v121 = vunpack.c.h.bf16 %v39
    %v122 = vunpack.c.l.bf16 %v40
    %v123 = vunpack.c.h.bf16 %v40
    %v124 = vunpack.c.l.bf16 %v41
    %v125 = vunpack.c.h.bf16 %v41
    %v126 = vunpack.c.l.bf16 %v42
    %v127 = vunpack.c.h.bf16 %v42
    %v128 = vunpack.c.l.bf16 %v43
    %v129 = vunpack.c.h.bf16 %v43
    %v130 = vunpack.c.l.bf16 %v44
    %v131 = vunpack.c.h.bf16 %v44
    %v132 = vunpack.c.l.bf16 %v45
    %v133 = vunpack.c.h.bf16 %v45
    %v134 = vunpack.c.l.bf16 %v46
    %v135 = vunpack.c.h.bf16 %v46
    %v136 = vunpack.c.l.bf16 %v47
    %v137 = vunpack.c.h.bf16 %v47
    %v138 = vunpack.c.l.bf16 %v48
    %v139 = vunpack.c.h.bf16 %v48
    %v140 = vunpack.c.l.bf16 %v49
    %v141 = vunpack.c.h.bf16 %v49
    %v142 = vunpack.c.l.bf16 %v50
    %v143 = vunpack.c.h.bf16 %v50
    %v144 = vunpack.c.l.bf16 %v51
    %v145 = vunpack.c.h.bf16 %v51
    %v146 = vunpack.c.l.bf16 %v52
    %v147 = vunpack.c.h.bf16 %v52
    %v148 = vunpack.c.l.bf16 %v53
    %v149 = vunpack.c.h.bf16 %v53
    %v150 = vunpack.c.l.bf16 %v54
    %v151 = vunpack.c.h.bf16 %v54
    %v152 = vunpack.c.l.bf16 %v55
    %v153 = vunpack.c.h.bf16 %v55
    %v154 = vunpack.c.l.bf16 %v56
    %v155 = vunpack.c.h.bf16 %v56
    %v156 = vunpack.c.l.bf16 %v57
    %v157 = vunpack.c.h.bf16 %v57
    %v158 = vunpack.c.l.bf16 %v58
    %v159 = vunpack.c.h.bf16 %v58
    %v160 = vunpack.c.l.bf16 %v59
    %v161 = vunpack.c.h.bf16 %v59
    %v162 = vunpack.c.l.bf16 %v60
    %v163 = vunpack.c.h.bf16 %v60
    %v164 = vunpack.c.l.bf16 %v61
    %v165 = vunpack.c.h.bf16 %v61
    %v166 = vunpack.c.l.bf16 %v62
    %v167 = vunpack.c.h.bf16 %v62
    %v168 = vunpack.c.l.bf16 %v63
    %v169 = vunpack.c.h.bf16 %v63
    %v170 = vunpack.c.l.bf16 %v64
    %v171 = vunpack.c.h.bf16 %v64
    %v172 = vunpack.c.l.bf16 %v65
    %v173 = vunpack.c.h.bf16 %v65
    %v174 = vunpack.c.l.bf16 %v66
    %v175 = vunpack.c.h.bf16 %v66
    %v176 = vunpack.c.l.bf16 %v67
    %v177 = vunpack.c.h.bf16 %v67
    %v178 = vunpack.c.l.bf16 %v68
    %v179 = vunpack.c.h.bf16 %v68
    %v180 = vunpack.c.l.bf16 %v69
    %v181 = vunpack.c.h.bf16 %v69
    %v182 = vunpack.c.l.bf16 %v70
    %v183 = vunpack.c.h.bf16 %v70
    %v184 = vunpack.c.l.bf16 %v71
    %v185 = vunpack.c.h.bf16 %v71
    %v186 = vunpack.c.l.bf16 %v72
    %v187 = vunpack.c.h.bf16 %v72
    %v188 = vunpack.c.l.bf16 %v73
    %v189 = vunpack.c.h.bf16 %v73
    %v190 = vunpack.c.l.bf16 %v74
    %v191 = vunpack.c.h.bf16 %v74
    %v192 = vunpack.c.l.bf16 %v75
    %v193 = vunpack.c.h.bf16 %v75
    %v194 = vunpack.c.l.bf16 %v76
    %v195 = vunpack.c.h.bf16 %v76
    %v196 = vunpack.c.l.bf16 %v77
    %v197 = vunpack.c.h.bf16 %v77
    %v198 = vunpack.c.l.bf16 %v78
    %v199 = vunpack.c.h.bf16 %v78
    %v200 = vunpack.c.l.bf16 %v79
    %v201 = vunpack.c.h.bf16 %v79
    %v202 = vunpack.c.l.bf16 %v80
    %v203 = vunpack.c.h.bf16 %v80
    %v204 = vunpack.c.l.bf16 %v81
    %v205 = vunpack.c.h.bf16 %v81
    %v206 = vunpack.c.l.bf16 %v82
    %v207 = vunpack.c.h.bf16 %v82
    %v208 = vunpack.c.l.bf16 %v83
    %v209 = vunpack.c.h.bf16 %v83
    %v210 = vunpack.c.l.bf16 %v84
    %v211 = vunpack.c.h.bf16 %v84
    %v212 = vunpack.c.l.bf16 %v85
    %v213 = vunpack.c.h.bf16 %v85
    %v214 = vmul.f32 %v86, %v86
    %v215 = vmul.f32 %v87, %v87
    %v216 = vmul.f32 %v88, %v88
    %v217 = vmul.f32 %v89, %v89
    %v218 = vmul.f32 %v90, %v90
    %v219 = vmul.f32 %v91, %v91
    %v220 = vmul.f32 %v92, %v92
    %v221 = vmul.f32 %v93, %v93
    %v222 = vmul.f32 %v94, %v94
    %v223 = vmul.f32 %v95, %v95
    %v224 = vmul.f32 %v96, %v96
    %v225 = vmul.f32 %v97, %v97
    %v226 = vmul.f32 %v98, %v98
    %v227 = vmul.f32 %v99, %v99
    %v228 = vmul.f32 %v100, %v100
    %v229 = vmul.f32 %v101, %v101
    %v230 = vmul.f32 %v102, %v102
    %v231 = vmul.f32 %v103, %v103
    %v232 = vmul.f32 %v104, %v104
    %v233 = vmul.f32 %v105, %v105
    %v234 = vmul.f32 %v106, %v106
    %v235 = vmul.f32 %v107, %v107
    %v236 = vmul.f32 %v108, %v108
    %v237 = vmul.f32 %v109, %v109
    %v238 = vmul.f32 %v110, %v110
    %v239 = vmul.f32 %v111, %v111
    %v240 = vmul.f32 %v112, %v112
    %v241 = vmul.f32 %v113, %v113
    %v242 = vmul.f32 %v114, %v114
    %v243 = vmul.f32 %v115, %v115
    %v244 = vmul.f32 %v116, %v116
    %v245 = vmul.f32 %v117, %v117
    %v246 = vmul.f32 %v118, %v118
    %v247 = vmul.f32 %v119, %v119
    %v248 = vmul.f32 %v120, %v120
    %v249 = vmul.f32 %v121, %v121
    %v250 = vmul.f32 %v122, %v122
    %v251 = vmul.f32 %v123, %v123
    %v252 = vmul.f32 %v124, %v124
    %v253 = vmul.f32 %v125, %v125
    %v254 = vmul.f32 %v126, %v126
    %v255 = vmul.f32 %v127, %v127
    %v256 = vmul.f32 %v128, %v128
    %v257 = vmul.f32 %v129, %v129
    %v258 = vmul.f32 %v130, %v130
    %v259 = vmul.f32 %v131, %v131
    %v260 = vmul.f32 %v132, %v132
    %v261 = vmul.f32 %v133, %v133
    %v262 = vmul.f32 %v134, %v134
    %v263 = vmul.f32 %v135, %v135
    %v264 = vmul.f32 %v136, %v136
    %v265 = vmul.f32 %v137, %v137
    %v266 = vmul.f32 %v138, %v138
    %v267 = vmul.f32 %v139, %v139
    %v268 = vmul.f32 %v140, %v140
    %v269 = vmul.f32 %v141, %v141
    %v270 = vmul.f32 %v142, %v142
    %v271 = vmul.f32 %v143, %v143
    %v272 = vmul.f32 %v144, %v144
    %v273 = vmul.f32 %v145, %v145
    %v274 = vmul.f32 %v146, %v146
    %v275 = vmul.f32 %v147, %v147
    %v276 = vmul.f32 %v148, %v148
    %v277 = vmul.f32 %v149, %v149
    %v278 = vmul.f32 %v150, %v150
    %v279 = vmul.f32 %v151, %v151
    %v280 = vmul.f32 %v152, %v152
    %v281 = vmul.f32 %v153, %v153
    %v282 = vmul.f32 %v154, %v154
    %v283 = vmul.f32 %v155, %v155
    %v284 = vmul.f32 %v156, %v156
    %v285 = vmul.f32 %v157, %v157
    %v286 = vmul.f32 %v158, %v158
    %v287 = vmul.f32 %v159, %v159
    %v288 = vmul.f32 %v160, %v160
    %v289 = vmul.f32 %v161, %v161
    %v290 = vmul.f32 %v162, %v162
    %v291 = vmul.f32 %v163, %v163
    %v292 = vmul.f32 %v164, %v164
    %v293 = vmul.f32 %v165, %v165
    %v294 = vmul.f32 %v166, %v166
    %v295 = vmul.f32 %v167, %v167
    %v296 = vmul.f32 %v168, %v168
    %v297 = vmul.f32 %v169, %v169
    %v298 = vmul.f32 %v170, %v170
    %v299 = vmul.f32 %v171, %v171
    %v300 = vmul.f32 %v172, %v172
    %v301 = vmul.f32 %v173, %v173
    %v302 = vmul.f32 %v174, %v174
    %v303 = vmul.f32 %v175, %v175
    %v304 = vmul.f32 %v176, %v176
    %v305 = vmul.f32 %v177, %v177
    %v306 = vmul.f32 %v178, %v178
    %v307 = vmul.f32 %v179, %v179
    %v308 = vmul.f32 %v180, %v180
    %v309 = vmul.f32 %v181, %v181
    %v310 = vmul.f32 %v182, %v182
    %v311 = vmul.f32 %v183, %v183
    %v312 = vmul.f32 %v184, %v184
    %v313 = vmul.f32 %v185, %v185
    %v314 = vmul.f32 %v186, %v186
    %v315 = vmul.f32 %v187, %v187
    %v316 = vmul.f32 %v188, %v188
    %v317 = vmul.f32 %v189, %v189
    %v318 = vmul.f32 %v190, %v190
    %v319 = vmul.f32 %v191, %v191
    %v320 = vmul.f32 %v192, %v192
    %v321 = vmul.f32 %v193, %v193
    %v322 = vmul.f32 %v194, %v194
    %v323 = vmul.f32 %v195, %v195
    %v324 = vmul.f32 %v196, %v196
    %v325 = vmul.f32 %v197, %v197
    %v326 = vmul.f32 %v198, %v198
    %v327 = vmul.f32 %v199, %v199
    %v328 = vmul.f32 %v200, %v200
    %v329 = vmul.f32 %v201, %v201
    %v330 = vmul.f32 %v202, %v202
    %v331 = vmul.f32 %v203, %v203
    %v332 = vmul.f32 %v204, %v204
    %v333 = vmul.f32 %v205, %v205
    %v334 = vmul.f32 %v206, %v206
    %v335 = vmul.f32 %v207, %v207
    %v336 = vmul.f32 %v208, %v208
    %v337 = vmul.f32 %v209, %v209
    %v338 = vmul.f32 %v210, %v210
    %v339 = vmul.f32 %v211, %v211
    %v340 = vmul.f32 %v212, %v212
    %v341 = vmul.f32 %v213, %v213
    %v342 = vadd.f32 %v214, %v215
    %v343 = vadd.f32 %v342, %v216
    %v344 = vadd.f32 %v343, %v217
    %345 = vadd.xlane.f32.xlu0 %v344
    %v346 = vpop.xlane.xlu0 %345
    %v347 = vadd.f32 %v218, %v219
    %v348 = vadd.f32 %v347, %v220
    %v349 = vadd.f32 %v348, %v221
    %350 = vadd.xlane.f32.xlu0 %v349
    %v351 = vpop.xlane.xlu0 %350
    %v352 = vadd.f32 %v222, %v223
    %v353 = vadd.f32 %v352, %v224
    %v354 = vadd.f32 %v353, %v225
    %355 = vadd.xlane.f32.xlu0 %v354
    %v356 = vpop.xlane.xlu0 %355
    %v357 = vadd.f32 %v226, %v227
    %v358 = vadd.f32 %v357, %v228
    %v359 = vadd.f32 %v358, %v229
    %360 = vadd.xlane.f32.xlu0 %v359
    %v361 = vpop.xlane.xlu0 %360
    %v362 = vadd.f32 %v230, %v231
    %v363 = vadd.f32 %v362, %v232
    %v364 = vadd.f32 %v363, %v233
    %365 = vadd.xlane.f32.xlu0 %v364
    %v366 = vpop.xlane.xlu0 %365
    %v367 = vadd.f32 %v234, %v235
    %v368 = vadd.f32 %v367, %v236
    %v369 = vadd.f32 %v368, %v237
    %370 = vadd.xlane.f32.xlu0 %v369
    %v371 = vpop.xlane.xlu0 %370
    %v372 = vadd.f32 %v238, %v239
    %v373 = vadd.f32 %v372, %v240
    %v374 = vadd.f32 %v373, %v241
    %375 = vadd.xlane.f32.xlu0 %v374
    %v376 = vpop.xlane.xlu0 %375
    %v377 = vadd.f32 %v242, %v243
    %v378 = vadd.f32 %v377, %v244
    %v379 = vadd.f32 %v378, %v245
    %380 = vadd.xlane.f32.xlu0 %v379
    %v381 = vpop.xlane.xlu0 %380
    %v382 = vadd.f32 %v246, %v247
    %v383 = vadd.f32 %v382, %v248
    %v384 = vadd.f32 %v383, %v249
    %385 = vadd.xlane.f32.xlu0 %v384
    %v386 = vpop.xlane.xlu0 %385
    %v387 = vadd.f32 %v250, %v251
    %v388 = vadd.f32 %v387, %v252
    %v389 = vadd.f32 %v388, %v253
    %390 = vadd.xlane.f32.xlu0 %v389
    %v391 = vpop.xlane.xlu0 %390
    %v392 = vadd.f32 %v254, %v255
    %v393 = vadd.f32 %v392, %v256
    %v394 = vadd.f32 %v393, %v257
    %395 = vadd.xlane.f32.xlu0 %v394
    %v396 = vpop.xlane.xlu0 %395
    %v397 = vadd.f32 %v258, %v259
    %v398 = vadd.f32 %v397, %v260
    %v399 = vadd.f32 %v398, %v261
    %400 = vadd.xlane.f32.xlu0 %v399
    %v401 = vpop.xlane.xlu0 %400
    %v402 = vadd.f32 %v262, %v263
    %v403 = vadd.f32 %v402, %v264
    %v404 = vadd.f32 %v403, %v265
    %405 = vadd.xlane.f32.xlu0 %v404
    %v406 = vpop.xlane.xlu0 %405
    %v407 = vadd.f32 %v266, %v267
    %v408 = vadd.f32 %v407, %v268
    %v409 = vadd.f32 %v408, %v269
    %410 = vadd.xlane.f32.xlu0 %v409
    %v411 = vpop.xlane.xlu0 %410
    %v412 = vadd.f32 %v270, %v271
    %v413 = vadd.f32 %v412, %v272
    %v414 = vadd.f32 %v413, %v273
    %415 = vadd.xlane.f32.xlu0 %v414
    %v416 = vpop.xlane.xlu0 %415
    %v417 = vadd.f32 %v274, %v275
    %v418 = vadd.f32 %v417, %v276
    %v419 = vadd.f32 %v418, %v277
    %420 = vadd.xlane.f32.xlu0 %v419
    %v421 = vpop.xlane.xlu0 %420
    %v422 = vadd.f32 %v278, %v279
    %v423 = vadd.f32 %v422, %v280
    %v424 = vadd.f32 %v423, %v281
    %425 = vadd.xlane.f32.xlu0 %v424
    %v426 = vpop.xlane.xlu0 %425
    %v427 = vadd.f32 %v282, %v283
    %v428 = vadd.f32 %v427, %v284
    %v429 = vadd.f32 %v428, %v285
    %430 = vadd.xlane.f32.xlu0 %v429
    %v431 = vpop.xlane.xlu0 %430
    %v432 = vadd.f32 %v286, %v287
    %v433 = vadd.f32 %v432, %v288
    %v434 = vadd.f32 %v433, %v289
    %435 = vadd.xlane.f32.xlu0 %v434
    %v436 = vpop.xlane.xlu0 %435
    %v437 = vadd.f32 %v290, %v291
    %v438 = vadd.f32 %v437, %v292
    %v439 = vadd.f32 %v438, %v293
    %440 = vadd.xlane.f32.xlu0 %v439
    %v441 = vpop.xlane.xlu0 %440
    %v442 = vadd.f32 %v294, %v295
    %v443 = vadd.f32 %v442, %v296
    %v444 = vadd.f32 %v443, %v297
    %445 = vadd.xlane.f32.xlu0 %v444
    %v446 = vpop.xlane.xlu0 %445
    %v447 = vadd.f32 %v298, %v299
    %v448 = vadd.f32 %v447, %v300
    %v449 = vadd.f32 %v448, %v301
    %450 = vadd.xlane.f32.xlu0 %v449
    %v451 = vpop.xlane.xlu0 %450
    %v452 = vadd.f32 %v302, %v303
    %v453 = vadd.f32 %v452, %v304
    %v454 = vadd.f32 %v453, %v305
    %455 = vadd.xlane.f32.xlu0 %v454
    %v456 = vpop.xlane.xlu0 %455
    %v457 = vadd.f32 %v306, %v307
    %v458 = vadd.f32 %v457, %v308
    %v459 = vadd.f32 %v458, %v309
    %460 = vadd.xlane.f32.xlu0 %v459
    %v461 = vpop.xlane.xlu0 %460
    %v462 = vadd.f32 %v310, %v311
    %v463 = vadd.f32 %v462, %v312
    %v464 = vadd.f32 %v463, %v313
    %465 = vadd.xlane.f32.xlu0 %v464
    %v466 = vpop.xlane.xlu0 %465
    %v467 = vadd.f32 %v314, %v315
    %v468 = vadd.f32 %v467, %v316
    %v469 = vadd.f32 %v468, %v317
    %470 = vadd.xlane.f32.xlu0 %v469
    %v471 = vpop.xlane.xlu0 %470
    %v472 = vadd.f32 %v318, %v319
    %v473 = vadd.f32 %v472, %v320
    %v474 = vadd.f32 %v473, %v321
    %475 = vadd.xlane.f32.xlu0 %v474
    %v476 = vpop.xlane.xlu0 %475
    %v477 = vadd.f32 %v322, %v323
    %v478 = vadd.f32 %v477, %v324
    %v479 = vadd.f32 %v478, %v325
    %480 = vadd.xlane.f32.xlu0 %v479
    %v481 = vpop.xlane.xlu0 %480
    %v482 = vadd.f32 %v326, %v327
    %v483 = vadd.f32 %v482, %v328
    %v484 = vadd.f32 %v483, %v329
    %485 = vadd.xlane.f32.xlu0 %v484
    %v486 = vpop.xlane.xlu0 %485
    %v487 = vadd.f32 %v330, %v331
    %v488 = vadd.f32 %v487, %v332
    %v489 = vadd.f32 %v488, %v333
    %490 = vadd.xlane.f32.xlu0 %v489
    %v491 = vpop.xlane.xlu0 %490
    %v492 = vadd.f32 %v334, %v335
    %v493 = vadd.f32 %v492, %v336
    %v494 = vadd.f32 %v493, %v337
    %495 = vadd.xlane.f32.xlu0 %v494
    %v496 = vpop.xlane.xlu0 %495
    %v497 = vadd.f32 %v338, %v339
    %v498 = vadd.f32 %v497, %v340
    %v499 = vadd.f32 %v498, %v341
    %500 = vadd.xlane.f32.xlu0 %v499
    %v501 = vpop.xlane.xlu0 %500
    %v502 = vrcp.pop 512.0
    %v503 = vmul.f32 %v346, %v502
    %v504 = vmul.f32 %v351, %v502
    %v505 = vmul.f32 %v356, %v502
    %v506 = vmul.f32 %v361, %v502
    %v507 = vmul.f32 %v366, %v502
    %v508 = vmul.f32 %v371, %v502
    %v509 = vmul.f32 %v376, %v502
    %v510 = vmul.f32 %v381, %v502
    %v511 = vmul.f32 %v386, %v502
    %v512 = vmul.f32 %v391, %v502
    %v513 = vmul.f32 %v396, %v502
    %v514 = vmul.f32 %v401, %v502
    %v515 = vmul.f32 %v406, %v502
    %v516 = vmul.f32 %v411, %v502
    %v517 = vmul.f32 %v416, %v502
    %v518 = vmul.f32 %v421, %v502
    %v519 = vmul.f32 %v426, %v502
    %v520 = vmul.f32 %v431, %v502
    %v521 = vmul.f32 %v436, %v502
    %v522 = vmul.f32 %v441, %v502
    %v523 = vmul.f32 %v446, %v502
    %v524 = vmul.f32 %v451, %v502
    %v525 = vmul.f32 %v456, %v502
    %v526 = vmul.f32 %v461, %v502
    %v527 = vmul.f32 %v466, %v502
    %v528 = vmul.f32 %v471, %v502
    %v529 = vmul.f32 %v476, %v502
    %v530 = vmul.f32 %v481, %v502
    %v531 = vmul.f32 %v486, %v502
    %v532 = vmul.f32 %v491, %v502
    %v533 = vmul.f32 %v496, %v502
    %v534 = vmul.f32 %v501, %v502
    %v535 = vadd.f32 %v503, 1e-06
    %v536 = vadd.f32 %v504, 1e-06
    %v537 = vadd.f32 %v505, 1e-06
    %v538 = vadd.f32 %v506, 1e-06
    %v539 = vadd.f32 %v507, 1e-06
    %v540 = vadd.f32 %v508, 1e-06
    %v541 = vadd.f32 %v509, 1e-06
    %v542 = vadd.f32 %v510, 1e-06
    %v543 = vadd.f32 %v511, 1e-06
    %v544 = vadd.f32 %v512, 1e-06
    %v545 = vadd.f32 %v513, 1e-06
    %v546 = vadd.f32 %v514, 1e-06
    %v547 = vadd.f32 %v515, 1e-06
    %v548 = vadd.f32 %v516, 1e-06
    %v549 = vadd.f32 %v517, 1e-06
    %v550 = vadd.f32 %v518, 1e-06
    %v551 = vadd.f32 %v519, 1e-06
    %v552 = vadd.f32 %v520, 1e-06
    %v553 = vadd.f32 %v521, 1e-06
    %v554 = vadd.f32 %v522, 1e-06
    %v555 = vadd.f32 %v523, 1e-06
    %v556 = vadd.f32 %v524, 1e-06
    %v557 = vadd.f32 %v525, 1e-06
    %v558 = vadd.f32 %v526, 1e-06
    %v559 = vadd.f32 %v527, 1e-06
    %v560 = vadd.f32 %v528, 1e-06
    %v561 = vadd.f32 %v529, 1e-06
    %v562 = vadd.f32 %v530, 1e-06
    %v563 = vadd.f32 %v531, 1e-06
    %v564 = vadd.f32 %v532, 1e-06
    %v565 = vadd.f32 %v533, 1e-06
    %v566 = vadd.f32 %v534, 1e-06
    %v567 = vrsqrt.pop %v535
    %v568 = vrsqrt.pop %v536
    %v569 = vrsqrt.pop %v537
    %v570 = vrsqrt.pop %v538
    %v571 = vrsqrt.pop %v539
    %v572 = vrsqrt.pop %v540
    %v573 = vrsqrt.pop %v541
    %v574 = vrsqrt.pop %v542
    %v575 = vrsqrt.pop %v543
    %v576 = vrsqrt.pop %v544
    %v577 = vrsqrt.pop %v545
    %v578 = vrsqrt.pop %v546
    %v579 = vrsqrt.pop %v547
    %v580 = vrsqrt.pop %v548
    %v581 = vrsqrt.pop %v549
    %v582 = vrsqrt.pop %v550
    %v583 = vrsqrt.pop %v551
    %v584 = vrsqrt.pop %v552
    %v585 = vrsqrt.pop %v553
    %v586 = vrsqrt.pop %v554
    %v587 = vrsqrt.pop %v555
    %v588 = vrsqrt.pop %v556
    %v589 = vrsqrt.pop %v557
    %v590 = vrsqrt.pop %v558
    %v591 = vrsqrt.pop %v559
    %v592 = vrsqrt.pop %v560
    %v593 = vrsqrt.pop %v561
    %v594 = vrsqrt.pop %v562
    %v595 = vrsqrt.pop %v563
    %v596 = vrsqrt.pop %v564
    %v597 = vrsqrt.pop %v565
    %v598 = vrsqrt.pop %v566
    %vm599 = vcmask 7168
    %600 = vst.msk [vmem:[%s1] sm:$0xff] %vm599, %v567
    %601 = vst.msk [vmem:[%s1 + $0x8] sm:$0xff] %vm599, %v568
    %602 = vst.msk [vmem:[%s1 + $0x10] sm:$0xff] %vm599, %v569
    %603 = vst.msk [vmem:[%s1 + $0x18] sm:$0xff] %vm599, %v570
    %604 = vst.msk [vmem:[%s1 + $0x20] sm:$0xff] %vm599, %v571
    %605 = vst.msk [vmem:[%s1 + $0x28] sm:$0xff] %vm599, %v572
    %606 = vst.msk [vmem:[%s1 + $0x30] sm:$0xff] %vm599, %v573
    %607 = vst.msk [vmem:[%s1 + $0x38] sm:$0xff] %vm599, %v574
    %608 = vst.msk [vmem:[%s1 + $0x40] sm:$0xff] %vm599, %v575
    %609 = vst.msk [vmem:[%s1 + $0x48] sm:$0xff] %vm599, %v576
    %610 = vst.msk [vmem:[%s1 + $0x50] sm:$0xff] %vm599, %v577
    %611 = vst.msk [vmem:[%s1 + $0x58] sm:$0xff] %vm599, %v578
    %612 = vst.msk [vmem:[%s1 + $0x60] sm:$0xff] %vm599, %v579
    %613 = vst.msk [vmem:[%s1 + $0x68] sm:$0xff] %vm599, %v580
    %614 = vst.msk [vmem:[%s1 + $0x70] sm:$0xff] %vm599, %v581
    %615 = vst.msk [vmem:[%s1 + $0x78] sm:$0xff] %vm599, %v582
    %616 = vst.msk [vmem:[%s1 + $0x80] sm:$0xff] %vm599, %v583
    %617 = vst.msk [vmem:[%s1 + $0x88] sm:$0xff] %vm599, %v584
    %618 = vst.msk [vmem:[%s1 + $0x90] sm:$0xff] %vm599, %v585
    %619 = vst.msk [vmem:[%s1 + $0x98] sm:$0xff] %vm599, %v586
    %620 = vst.msk [vmem:[%s1 + $0xa0] sm:$0xff] %vm599, %v587
    %621 = vst.msk [vmem:[%s1 + $0xa8] sm:$0xff] %vm599, %v588
    %622 = vst.msk [vmem:[%s1 + $0xb0] sm:$0xff] %vm599, %v589
    %623 = vst.msk [vmem:[%s1 + $0xb8] sm:$0xff] %vm599, %v590
    %624 = vst.msk [vmem:[%s1 + $0xc0] sm:$0xff] %vm599, %v591
    %625 = vst.msk [vmem:[%s1 + $0xc8] sm:$0xff] %vm599, %v592
    %626 = vst.msk [vmem:[%s1 + $0xd0] sm:$0xff] %vm599, %v593
    %627 = vst.msk [vmem:[%s1 + $0xd8] sm:$0xff] %vm599, %v594
    %628 = vst.msk [vmem:[%s1 + $0xe0] sm:$0xff] %vm599, %v595
    %629 = vst.msk [vmem:[%s1 + $0xe8] sm:$0xff] %vm599, %v596
    %630 = vst.msk [vmem:[%s1 + $0xf0] sm:$0xff] %vm599, %v597
    %631 = vst.msk [vmem:[%s1 + $0xf8] sm:$0xff] %vm599, %v598
    // Predicated region
    $region10: #{tpu_custom_call.1} parent=1 // pred_check
      _
    $region11: #{tpu_custom_call.1} parent=1 // pred_check_branch
      %633 = sbr.rel (0) target = $region13
    $region12: #{tpu_custom_call.1} parent=1 // pred_region
      _
    $region13: #{tpu_custom_call.1} parent=1 // pred_fallthru
      _
    // Predicated region
    $region14: #{tpu_custom_call.1} parent=1 // pred_check
      _
    $region15: #{tpu_custom_call.1} parent=1 // pred_check_branch
      %635 = sbr.rel (0) target = $region17
    $region16: #{tpu_custom_call.1} parent=1 // pred_region
      _
    $region17: #{tpu_custom_call.1} parent=1 // pred_fallthru
      _
    %636 = vsyncpa [#allocation3], 1

</llo_original>
